<compile_context>
chip_gen: v7x
topology: tpu7x:2x2x1
jax: 0.10.0
libtpu: 0.0.40
codegen_flags: <defaults>
</compile_context>

<pallas_src>
import functools
import math

import jax
import jax.numpy as jnp
from jax.experimental import pallas as pl
from jax.experimental.pallas import tpu as pltpu


def _arcface_kernel(x_ref, label_ref, w_ref, out_ref, inv_w_ref, *,
                    s, cos_m, sin_m, th, mm, tile_c):
    j = pl.program_id(0)  # class-tile index (outer)
    i = pl.program_id(1)  # batch-tile index (inner)

    # inv|w| for this class tile, computed once per class tile from the
    # VMEM-resident weight tile (no extra wrapper HBM pass over the weight).
    @pl.when(i == 0)
    def _():
        wf = w_ref[...].astype(jnp.float32)                  # (tile_c, E)
        e_dim = wf.shape[1]
        # ones(1,E) . (w*w) contracting E on both sides -> sum of squares
        # delivered directly in the (1, tile_c) lane-major layout we need.
        ssq = jax.lax.dot_general(
            jnp.ones((1, e_dim), jnp.float32), wf * wf,
            dimension_numbers=(((1,), (1,)), ((), ())),
            preferred_element_type=jnp.float32)               # (1, tile_c)
        inv_w_ref[...] = jax.lax.rsqrt(jnp.maximum(ssq, 1e-24))

    x = x_ref[...]                                            # (tile_b, E)  pre-normalized
    w = w_ref[...]                                            # (tile_c, E)

    # Raw dot product on the MXU, contracting the embedding axis of both
    # operands directly (no materialized transpose), f32 accumulation.
    raw = jax.lax.dot_general(
        x, w, dimension_numbers=(((1,), (1,)), ((), ())),
        preferred_element_type=jnp.float32)                   # (tile_b, tile_c)
    cosine = raw * inv_w_ref[...]                             # scale by inv|w|

    # One-hot of the label restricted to this class tile (local iota).
    label_local = label_ref[...] - j * tile_c                 # (tile_b, 1)
    col_iota = jax.lax.broadcasted_iota(jnp.int32, cosine.shape, 1)
    one_hot = label_local == col_iota                         # (tile_b, tile_c) bool

    # Per-row margin: only the target logit receives phi, so compute it on a
    # (tile_b, 1) vector (zero / unused where the target is not in this tile).
    cos_t = jnp.sum(jnp.where(one_hot, cosine, 0.0), axis=-1, keepdims=True)
    sin_t = jnp.sqrt(jnp.clip(1.0 - cos_t * cos_t, 0.0, 1.0))
    phi_t = cos_t * cos_m - sin_t * sin_m
    phi_t = jnp.where(cos_t > th, phi_t, cos_t - mm)          # easy_margin=False
    delta = (phi_t - cos_t) * s                               # (tile_b, 1)

    out = cosine * s + jnp.where(one_hot, delta, 0.0)
    out_ref[...] = out.astype(out_ref.dtype)


def _vmem_capacity_bytes():
    try:
        cap = int(pltpu.get_tpu_info().vmem_capacity_bytes)
        if cap > 0:
            return cap
    except Exception:
        pass
    return 64 * 1024 * 1024  # conservative default: v7x per-TensorCore VMEM


def _working_set_bytes(tile_b, tile_c, E, in_itemsize, out_itemsize):
    w_buf = 2 * tile_c * E * in_itemsize           # weight tile, double-buffered
    o_buf = 2 * tile_b * tile_c * out_itemsize     # output tile, double-buffered
    x_buf = 2 * tile_b * E * in_itemsize           # x tile (constant index; count 2)
    lbl = 2 * max(tile_b, 8) * 128 * 4             # (tile_b, 1) label, lane-padded
    inv_w = 8 * tile_c * 4                         # (1, tile_c) scratch, sublane-padded
    wsq = 2 * tile_c * E * 4                       # in-kernel f32 weight-square temp
    interm = 2 * tile_b * tile_c * 4               # epilogue f32 intermediates headroom
    return w_buf + o_buf + x_buf + lbl + inv_w + wsq + interm


def _pick_tiles(B, C, E, in_itemsize, out_itemsize, budget):
    tb_cands = sorted({B} | {t for t in (2048, 1024, 512, 256, 128, 64, 32, 16, 8)
                             if t < B and B % t == 0}, reverse=True)
    tc_cands = sorted({t for t in (4096, 2048, 1024, 512, 256, 128)
                       if t <= C and C % t == 0} | {C}, reverse=True)
    for tb in tb_cands:          # prefer tile_b = B (grid-resident x)
        for tc in tc_cands:      # then the largest class tile that fits
            if _working_set_bytes(tb, tc, E, in_itemsize, out_itemsize) <= budget:
                return tb, tc
    # TODO(synk): very large class counts with no multiple-of-128 divisor would
    # need class-axis padding; fall back to the smallest candidates.
    return tb_cands[-1], tc_cands[-1]


def arcface_forward(x, label, weight, *, s=32.0, m=0.5,
                    compute_dtype=jnp.bfloat16, out_dtype=jnp.float32,
                    tile_b=None, tile_c=None):
    """x: (B, E) raw embeddings; label: (B,) int; weight: (C, E). Returns (B, C)."""
    B, E = x.shape
    C, E2 = weight.shape
    assert E == E2

    in_itemsize = jnp.dtype(compute_dtype).itemsize
    out_itemsize = jnp.dtype(out_dtype).itemsize

    cap = _vmem_capacity_bytes()
    budget = int(cap * 0.55)                  # working-set budget, spill headroom left
    if tile_b is None or tile_c is None:
        tb, tc = _pick_tiles(B, C, E, in_itemsize, out_itemsize, budget)
        tile_b = tb if tile_b is None else tile_b
        tile_c = tc if tile_c is None else tile_c
    assert B % tile_b == 0 and C % tile_c == 0

    cos_m = math.cos(m)
    sin_m = math.sin(m)
    th = math.cos(math.pi - m)
    mm = math.sin(math.pi - m) * m

    # F.normalize(x): x / max(||x||, 1e-12) == x * rsqrt(max(||x||^2, 1e-24)).
    # Folded into x once here (tiny B*E op) -> kernel never rescales by inv|x|,
    # and bf16 cosine accuracy improves (normalized values cast to bf16).
    xf = x.astype(jnp.float32)
    inv_x = jax.lax.rsqrt(
        jnp.maximum(jnp.sum(xf * xf, axis=-1, keepdims=True), 1e-24))
    x_mm = (xf * inv_x).astype(compute_dtype)

    w_mm = weight.astype(compute_dtype)       # single wrapper pass over the weight
    label2d = label.reshape(B, 1).astype(jnp.int32)

    ws = _working_set_bytes(tile_b, tile_c, E, in_itemsize, out_itemsize)
    vmem_limit = int(min(cap * 0.85, max(2 * ws, 32 * 1024 * 1024)))

    kernel = functools.partial(
        _arcface_kernel, s=float(s), cos_m=cos_m, sin_m=sin_m,
        th=th, mm=mm, tile_c=tile_c)

    return pl.pallas_call(
        kernel,
        out_shape=jax.ShapeDtypeStruct((B, C), out_dtype),
        grid_spec=pltpu.PrefetchScalarGridSpec(
            num_scalar_prefetch=0,
            # Class axis OUTER: the (tile_c, E) weight tile (and its inv-norms)
            # stay VMEM-resident across the inner batch loop; x / label blocks
            # have a constant index along the class axis -> DMA'd once.
            grid=(C // tile_c, B // tile_b),
            in_specs=[
                pl.BlockSpec((tile_b, E), lambda j, i: (i, 0)),   # normalized x
                pl.BlockSpec((tile_b, 1), lambda j, i: (i, 0)),   # label
                pl.BlockSpec((tile_c, E), lambda j, i: (j, 0)),   # weight
            ],
            out_specs=pl.BlockSpec((tile_b, tile_c), lambda j, i: (i, j)),
            scratch_shapes=[pltpu.VMEM((1, tile_c), jnp.float32)],  # inv|w|
        ),
        compiler_params=pltpu.CompilerParams(
            # class axis "parallel" -> megacore shards the weight stream;
            # batch axis "arbitrary" (inner, reuses the resident weight tile).
            dimension_semantics=("parallel", "arbitrary"),
            vmem_limit_bytes=vmem_limit),
    )(x_mm, label2d, w_mm)


def arcface_reference(x, label, weight, *, s=32.0, m=0.5):
    """Pure-JAX f32 reference mirroring the PyTorch Arcface forward (train mode)."""
    cos_m, sin_m = math.cos(m), math.sin(m)
    th = math.cos(math.pi - m)
    mm = math.sin(math.pi - m) * m
    xn = x / jnp.maximum(jnp.linalg.norm(x, axis=1, keepdims=True), 1e-12)
    wn = weight / jnp.maximum(jnp.linalg.norm(weight, axis=1, keepdims=True), 1e-12)
    cosine = xn @ wn.T
    sine = jnp.sqrt(jnp.clip(1.0 - cosine ** 2, 0.0, 1.0))
    phi = cosine * cos_m - sine * sin_m
    phi = jnp.where(cosine > th, phi, cosine - mm)
    one_hot = jax.nn.one_hot(label, weight.shape[0], dtype=jnp.float32)
    return (one_hot * phi + (1.0 - one_hot) * cosine) * s


if __name__ == "__main__":
    # Small shapes: mobilefacenet backbone -> embedding_size=128, s=32.
    B, E, C = 8, 128, 256
    s, m = 32.0, 0.5

    key = jax.random.PRNGKey(0)
    kx, kw, kl = jax.random.split(key, 3)

    # Synthetic backbone output (the flattened embeddings fed to F.normalize).
    x = jax.random.normal(kx, (B, E), dtype=jnp.float32)

    # Arcface_Head weight: (num_classes, embedding_size), xavier_uniform_.
    limit = math.sqrt(6.0 / (E + C))
    weight = jax.random.uniform(kw, (C, E), dtype=jnp.float32,
                                minval=-limit, maxval=limit)

    label = jax.random.randint(kl, (B,), 0, C, dtype=jnp.int32)

    ref = arcface_reference(x, label, weight, s=s, m=m)

    # Exact-semantics path (f32 operands): tight tolerance.
    out_f32 = arcface_forward(x, label, weight, s=s, m=m,
                              compute_dtype=jnp.float32)
    out_f32 = jax.block_until_ready(out_f32)
    assert out_f32.shape == (B, C)
    assert jnp.allclose(out_f32, ref, atol=2e-4, rtol=2e-4), "f32 mismatch"

    # Fast path (bf16 operand streaming, f32 MXU accumulation): bf16 tolerance.
    out_bf16 = arcface_forward(x, label, weight, s=s, m=m,
                               compute_dtype=jnp.bfloat16)
    out_bf16 = jax.block_until_ready(out_bf16)
    assert out_bf16.shape == (B, C)
    assert jnp.allclose(out_bf16, ref, atol=0.5, rtol=0.05), "bf16 mismatch"

    print("KERNEL_OK")
</pallas_src>

<mosaic_0001>
module attributes {stable_mosaic.version = 11 : i64} {
  func.func @_arcface_kernel(%arg0: i32, %arg1: i32, %arg2: memref<8x128xf32, #tpu.memory_space<vmem>>, %arg3: memref<8x1xi32, #tpu.memory_space<vmem>>, %arg4: memref<256x128xf32, #tpu.memory_space<vmem>>, %arg5: memref<8x256xf32, #tpu.memory_space<vmem>>, %arg6: memref<1x256xf32, #tpu.memory_space<vmem>>) attributes {dimension_semantics = [#tpu.dimension_semantics<parallel>, #tpu.dimension_semantics<arbitrary>], iteration_bounds = array<i64: 1, 1>, scalar_prefetch = 0 : i64, scratch_operands = 1 : i64, tpu.core_type = #tpu.core_type<tc>, window_params = [{transform_indices = @transform_0, window_bounds = array<i64: 8, 128>}, {transform_indices = @transform_1, window_bounds = array<i64: 8, 1>}, {transform_indices = @transform_2, window_bounds = array<i64: 256, 128>}, {transform_indices = @transform_3, window_bounds = array<i64: 8, 256>}]} {
    %c0_i32 = arith.constant 0 : i32
    %0 = arith.cmpi eq, %arg1, %c0_i32 : i32
    %1 = arith.extui %0 : i1 to i32
    %c0_i32_0 = arith.constant 0 : i32
    %2 = arith.cmpi ne, %1, %c0_i32_0 : i32
    scf.if %2 {
      %c0_22 = arith.constant 0 : index
      %c0_23 = arith.constant 0 : index
      %49 = vector.load %arg4[%c0_22, %c0_23] : memref<256x128xf32, #tpu.memory_space<vmem>>, vector<256x128xf32>
      %cst_24 = arith.constant 1.000000e+00 : f32
      %50 = vector.broadcast %cst_24 : f32 to vector<1x128xf32>
      %51 = arith.mulf %49, %49 : vector<256x128xf32>
      %cst_25 = arith.constant dense<0.000000e+00> : vector<1x256xf32>
      %52 = tpu.matmul %50, %51, %cst_25 {dimension_numbers = #tpu.dot_dimension_numbers<[1], [1], [0], [0], [0, 0, 1, 0], [], []>} : vector<1x128xf32>, vector<256x128xf32>, vector<1x256xf32> -> vector<1x256xf32>
      %cst_26 = arith.constant 1.000000e-24 : f32
      %53 = vector.broadcast %cst_26 : f32 to vector<1x256xf32>
      %54 = arith.maximumf %52, %53 : vector<1x256xf32>
      %55 = math.rsqrt %54 : vector<1x256xf32>
      %c0_27 = arith.constant 0 : index
      %c0_28 = arith.constant 0 : index
      %56 = vector.load %arg6[%c0_27, %c0_28] : memref<1x256xf32, #tpu.memory_space<vmem>>, vector<1x256xf32>
      tpu.vector_store %arg6[%c0_27, %c0_28], %55 {strides = array<i32>} : memref<1x256xf32, #tpu.memory_space<vmem>>, vector<1x256xf32>,
    } else {
    }
    %c0 = arith.constant 0 : index
    %c0_1 = arith.constant 0 : index
    %3 = vector.load %arg2[%c0, %c0_1] : memref<8x128xf32, #tpu.memory_space<vmem>>, vector<8x128xf32>
    %c0_2 = arith.constant 0 : index
    %c0_3 = arith.constant 0 : index
    %4 = vector.load %arg4[%c0_2, %c0_3] : memref<256x128xf32, #tpu.memory_space<vmem>>, vector<256x128xf32>
    %cst = arith.constant dense<0.000000e+00> : vector<8x256xf32>
    %5 = tpu.matmul %3, %4, %cst {dimension_numbers = #tpu.dot_dimension_numbers<[1], [1], [0], [0], [0, 0, 1, 0], [], []>} : vector<8x128xf32>, vector<256x128xf32>, vector<8x256xf32> -> vector<8x256xf32>
    %c0_4 = arith.constant 0 : index
    %c0_5 = arith.constant 0 : index
    %6 = vector.load %arg6[%c0_4, %c0_5] : memref<1x256xf32, #tpu.memory_space<vmem>>, vector<1x256xf32>
    %7 = vector.broadcast %6 : vector<1x256xf32> to vector<8x256xf32>
    %8 = arith.mulf %5, %7 : vector<8x256xf32>
    %c0_6 = arith.constant 0 : index
    %c0_7 = arith.constant 0 : index
    %9 = vector.load %arg3[%c0_6, %c0_7] : memref<8x1xi32, #tpu.memory_space<vmem>>, vector<8x1xi32>
    %c256_i32 = arith.constant 256 : i32
    %10 = arith.muli %arg0, %c256_i32 : i32
    %11 = vector.broadcast %10 : i32 to vector<8x1xi32>
    %12 = arith.subi %9, %11 : vector<8x1xi32>
    %13 = tpu.iota {dimensions = array<i32: 1>} : vector<8x256xi32>
    %14 = vector.broadcast %12 : vector<8x1xi32> to vector<8x256xi32>
    %15 = arith.cmpi eq, %14, %13 : vector<8x256xi32>
    %cst_8 = arith.constant 0.000000e+00 : f32
    %16 = vector.broadcast %cst_8 : f32 to vector<8x256xf32>
    %17 = arith.select %15, %8, %16 : vector<8x256xi1>, vector<8x256xf32>
    %cst_9 = arith.constant dense<0.000000e+00> : vector<8xf32>
    %18 = vector.multi_reduction <add>, %17, %cst_9 [1] : vector<8x256xf32> to vector<8xf32>
    %19 = vector.shape_cast %18 : vector<8xf32> to vector<8x1xf32>
    %20 = arith.mulf %19, %19 : vector<8x1xf32>
    %cst_10 = arith.constant 1.000000e+00 : f32
    %21 = vector.broadcast %cst_10 : f32 to vector<8x1xf32>
    %22 = arith.subf %21, %20 : vector<8x1xf32>
    %cst_11 = arith.constant 0.000000e+00 : f32
    %cst_12 = arith.constant 1.000000e+00 : f32
    %23 = vector.broadcast %cst_11 : f32 to vector<8x1xf32>
    %24 = arith.maximumf %23, %22 : vector<8x1xf32>
    %25 = vector.broadcast %cst_12 : f32 to vector<8x1xf32>
    %26 = arith.minimumf %25, %24 : vector<8x1xf32>
    %27 = math.sqrt %26 : vector<8x1xf32>
    %cst_13 = arith.constant 0.87758255 : f32
    %28 = vector.broadcast %cst_13 : f32 to vector<8x1xf32>
    %29 = arith.mulf %19, %28 : vector<8x1xf32>
    %cst_14 = arith.constant 0.47942555 : f32
    %30 = vector.broadcast %cst_14 : f32 to vector<8x1xf32>
    %31 = arith.mulf %27, %30 : vector<8x1xf32>
    %32 = arith.subf %29, %31 : vector<8x1xf32>
    %cst_15 = arith.constant -0.87758255 : f32
    %33 = vector.broadcast %cst_15 : f32 to vector<8x1xf32>
    %34 = arith.cmpf ogt, %19, %33 : vector<8x1xf32>
    %cst_16 = arith.constant 0.239712775 : f32
    %35 = vector.broadcast %cst_16 : f32 to vector<8x1xf32>
    %36 = arith.subf %19, %35 : vector<8x1xf32>
    %37 = arith.select %34, %32, %36 : vector<8x1xi1>, vector<8x1xf32>
    %38 = arith.subf %37, %19 : vector<8x1xf32>
    %cst_17 = arith.constant 3.200000e+01 : f32
    %39 = vector.broadcast %cst_17 : f32 to vector<8x1xf32>
    %40 = arith.mulf %38, %39 : vector<8x1xf32>
    %cst_18 = arith.constant 3.200000e+01 : f32
    %41 = vector.broadcast %cst_18 : f32 to vector<8x256xf32>
    %42 = arith.mulf %8, %41 : vector<8x256xf32>
    %cst_19 = arith.constant 0.000000e+00 : f32
    %43 = vector.shape_cast %40 : vector<8x1xf32> to vector<8x1xf32>
    %44 = vector.broadcast %43 : vector<8x1xf32> to vector<8x256xf32>
    %45 = vector.broadcast %cst_19 : f32 to vector<8x256xf32>
    %46 = arith.select %15, %44, %45 : vector<8x256xi1>, vector<8x256xf32>
    %47 = arith.addf %42, %46 : vector<8x256xf32>
    %c0_20 = arith.constant 0 : index
    %c0_21 = arith.constant 0 : index
    %48 = vector.load %arg5[%c0_20, %c0_21] : memref<8x256xf32, #tpu.memory_space<vmem>>, vector<8x256xf32>
    tpu.vector_store %arg5[%c0_20, %c0_21], %47 {strides = array<i32>} : memref<8x256xf32, #tpu.memory_space<vmem>>, vector<8x256xf32>,
    return
  }
  func.func @transform_0(%arg0: i32, %arg1: i32) -> (i32, i32) {
    %c0_i32 = arith.constant 0 : i32
    %c0_i32_0 = arith.constant 0 : i32
    return %arg1, %c0_i32 : i32, i32
  }
  func.func @transform_1(%arg0: i32, %arg1: i32) -> (i32, i32) {
    %c0_i32 = arith.constant 0 : i32
    %c0_i32_0 = arith.constant 0 : i32
    return %arg1, %c0_i32 : i32, i32
  }
  func.func @transform_2(%arg0: i32, %arg1: i32) -> (i32, i32) {
    %c0_i32 = arith.constant 0 : i32
    %c0_i32_0 = arith.constant 0 : i32
    return %arg0, %c0_i32 : i32, i32
  }
  func.func @transform_3(%arg0: i32, %arg1: i32) -> (i32, i32) {
    %c0_i32 = arith.constant 0 : i32
    return %arg1, %arg0 : i32, i32
  }
}

</mosaic_0001>

<llo_original>
// kernel: tpu_custom_call.1
$region0: #{tpu_custom_call.1}
  #allocation0 [shape = 'u32[]', space=smem, size = 0x4, offset = 0x4, fixed_abs, tag = 'smem constant byte address 0x4 - core index']
  #allocation1 [shape = 'u32[144,128]{1,0:T(1,128)}', space=vmem, size = 0x12000, scoped, tag = 'internal scratch']
  #allocation2 [shape = 'f32[1,256]{1,0:T(1,128)}', space=vmem, size = 0x400, scoped, tag = 'scratch operand']
  %s0 = inlined_call_operand.vmem [shape: f32[8,128], index: 0, kind: input, shape index: {}]
  %s1 = inlined_call_operand.vmem [shape: s32[8,1], index: 1, kind: input, shape index: {}]
  %s2 = inlined_call_operand.hbm [shape: f32[256,128], index: 2, kind: input, shape index: {}]
  %s3 = inlined_call_operand.hbm [shape: f32[8,256], index: 3, kind: output, shape index: {}]
  %s4 = sld [smem:[#allocation0]]
  $region30: #{tpu_custom_call.1} parent=0
    _
  %s6 = ssub.s32 1, %s4
  %s7 = scalar_select 0, %s6, %s4
  $region1: #{tpu_custom_call.1} parent=0
    #allocation3 [shape = 'u8[131072]{0}', space=vmem, size = 0x20000, scoped, tag = 'input window, operand 2, single buffered']
    #allocation4 [shape = 's32[1]{0}', space=sflag, size = 0x4, scoped, tag = 'scoped memory for tpu_custom_call.1']
    #allocation5 [shape = 's32[1]{0}', space=sflag, size = 0x4, scoped, tag = 'scoped memory for tpu_custom_call.1']
    #allocation6 [shape = 'u8[8192]{0}', space=vmem, size = 0x2000, scoped, tag = 'output window, operand 0, single buffered']
    %8 = vsyncpa [#allocation4], 0
    %9 = vsyncpa [#allocation5], 0
    // Predicated region
    $region2: #{tpu_custom_call.1} parent=1 // pred_check
      _
    $region3: #{tpu_custom_call.1} parent=1 // pred_check_branch
      %11 = sbr.rel (0) target = $region5
    $region4: #{tpu_custom_call.1} parent=1 // pred_region
      _
    $region5: #{tpu_custom_call.1} parent=1 // pred_fallthru
      _
    // Predicated region
    $region6: #{tpu_custom_call.1} parent=1 // pred_check
      _
    $region7: #{tpu_custom_call.1} parent=1 // pred_check_branch
      %13 = sbr.rel (0) target = $region9
    $region8: #{tpu_custom_call.1} parent=1 // pred_region
      _
    $region9: #{tpu_custom_call.1} parent=1 // pred_fallthru
      _
    // Predicated region
    $region10: #{tpu_custom_call.1} parent=1 // pred_check
      _
    $region11: #{tpu_custom_call.1} parent=1 // pred_check_branch
      %15 = sbr.rel (0) target = $region13
    $region12: #{tpu_custom_call.1} parent=1 // pred_region
      %s17 = ssub.s32 4096, 4096
      %18 = vsyncadd [#allocation4], %s17
      %s19 = sshll.u32 [#allocation3], 4
      %s20 = int_to_ptr.vmem [resolvable:$true] %s19
      %25 = dma.hbm_to_vmem [thread:$0]  %s2, 4096, %s20, [#allocation4], 128, 128, 8
    $region13: #{tpu_custom_call.1} parent=1 // pred_fallthru
      _
    // Predicated region
    $region14: #{tpu_custom_call.1} parent=1 // pred_check
      _
    $region15: #{tpu_custom_call.1} parent=1 // pred_check_branch
      %27 = sbr.rel (0) target = $region17
    $region16: #{tpu_custom_call.1} parent=1 // pred_region
      %28 = dma.done [#allocation4], 4096
    $region17: #{tpu_custom_call.1} parent=1 // pred_fallthru
      _
    %p29 = scmp.eq.s32.totalorder 0, 0
    // Predicated region
    $region18: #{tpu_custom_call.1} parent=1 // pred_check
      %p30 = pneg %p29
    $region19: #{tpu_custom_call.1} parent=1 // pred_check_branch
      %32 = sbr.rel (%p30) target = $region21
    $region20: #{tpu_custom_call.1} parent=1 // pred_region
      %v33 = vld [vmem:[#allocation3] sm:$0xff]
      %v34 = vld [vmem:[#allocation3 + $0x8] sm:$0xff]
      %v35 = vld [vmem:[#allocation3 + $0x10] sm:$0xff]
      %v36 = vld [vmem:[#allocation3 + $0x18] sm:$0xff]
      %v37 = vld [vmem:[#allocation3 + $0x20] sm:$0xff]
      %v38 = vld [vmem:[#allocation3 + $0x28] sm:$0xff]
      %v39 = vld [vmem:[#allocation3 + $0x30] sm:$0xff]
      %v40 = vld [vmem:[#allocation3 + $0x38] sm:$0xff]
      %v41 = vld [vmem:[#allocation3 + $0x40] sm:$0xff]
      %v42 = vld [vmem:[#allocation3 + $0x48] sm:$0xff]
      %v43 = vld [vmem:[#allocation3 + $0x50] sm:$0xff]
      %v44 = vld [vmem:[#allocation3 + $0x58] sm:$0xff]
      %v45 = vld [vmem:[#allocation3 + $0x60] sm:$0xff]
      %v46 = vld [vmem:[#allocation3 + $0x68] sm:$0xff]
      %v47 = vld [vmem:[#allocation3 + $0x70] sm:$0xff]
      %v48 = vld [vmem:[#allocation3 + $0x78] sm:$0xff]
      %v49 = vld [vmem:[#allocation3 + $0x80] sm:$0xff]
      %v50 = vld [vmem:[#allocation3 + $0x88] sm:$0xff]
      %v51 = vld [vmem:[#allocation3 + $0x90] sm:$0xff]
      %v52 = vld [vmem:[#allocation3 + $0x98] sm:$0xff]
      %v53 = vld [vmem:[#allocation3 + $0xa0] sm:$0xff]
      %v54 = vld [vmem:[#allocation3 + $0xa8] sm:$0xff]
      %v55 = vld [vmem:[#allocation3 + $0xb0] sm:$0xff]
      %v56 = vld [vmem:[#allocation3 + $0xb8] sm:$0xff]
      %v57 = vld [vmem:[#allocation3 + $0xc0] sm:$0xff]
      %v58 = vld [vmem:[#allocation3 + $0xc8] sm:$0xff]
      %v59 = vld [vmem:[#allocation3 + $0xd0] sm:$0xff]
      %v60 = vld [vmem:[#allocation3 + $0xd8] sm:$0xff]
      %v61 = vld [vmem:[#allocation3 + $0xe0] sm:$0xff]
      %v62 = vld [vmem:[#allocation3 + $0xe8] sm:$0xff]
      %v63 = vld [vmem:[#allocation3 + $0xf0] sm:$0xff]
      %v64 = vld [vmem:[#allocation3 + $0xf8] sm:$0xff]
      %v65 = vmul.f32 %v33, %v33
      %v66 = vmul.f32 %v34, %v34
      %v67 = vmul.f32 %v35, %v35
      %v68 = vmul.f32 %v36, %v36
      %v69 = vmul.f32 %v37, %v37
      %v70 = vmul.f32 %v38, %v38
      %v71 = vmul.f32 %v39, %v39
      %v72 = vmul.f32 %v40, %v40
      %v73 = vmul.f32 %v41, %v41
      %v74 = vmul.f32 %v42, %v42
      %v75 = vmul.f32 %v43, %v43
      %v76 = vmul.f32 %v44, %v44
      %v77 = vmul.f32 %v45, %v45
      %v78 = vmul.f32 %v46, %v46
      %v79 = vmul.f32 %v47, %v47
      %v80 = vmul.f32 %v48, %v48
      %v81 = vmul.f32 %v49, %v49
      %v82 = vmul.f32 %v50, %v50
      %v83 = vmul.f32 %v51, %v51
      %v84 = vmul.f32 %v52, %v52
      %v85 = vmul.f32 %v53, %v53
      %v86 = vmul.f32 %v54, %v54
      %v87 = vmul.f32 %v55, %v55
      %v88 = vmul.f32 %v56, %v56
      %v89 = vmul.f32 %v57, %v57
      %v90 = vmul.f32 %v58, %v58
      %v91 = vmul.f32 %v59, %v59
      %v92 = vmul.f32 %v60, %v60
      %v93 = vmul.f32 %v61, %v61
      %v94 = vmul.f32 %v62, %v62
      %v95 = vmul.f32 %v63, %v63
      %v96 = vmul.f32 %v64, %v64
      %97 = vmatprep.subr.mxu0 0.0
      %98 = vmatpush1.xpose.msra.mxu0 %v65
      %99 = vmatprep.subr.mxu0 0.0
      %100 = vmatpush1.xpose.msra.mxu0 %v66
      %101 = vmatprep.subr.mxu0 0.0
      %102 = vmatpush1.xpose.msra.mxu0 %v67
      %103 = vmatprep.subr.mxu0 0.0
      %104 = vmatpush1.xpose.msra.mxu0 %v68
      %105 = vmatprep.subr.mxu0 0.0
      %106 = vmatpush1.xpose.msra.mxu0 %v69
      %107 = vmatprep.subr.mxu0 0.0
      %108 = vmatpush1.xpose.msra.mxu0 %v70
      %109 = vmatprep.subr.mxu0 0.0
      %110 = vmatpush1.xpose.msra.mxu0 %v71
      %111 = vmatprep.subr.mxu0 0.0
      %112 = vmatpush1.xpose.msra.mxu0 %v72
      %113 = vmatprep.subr.mxu0 0.0
      %114 = vmatpush1.xpose.msra.mxu0 %v73
      %115 = vmatprep.subr.mxu0 0.0
      %116 = vmatpush1.xpose.msra.mxu0 %v74
      %117 = vmatprep.subr.mxu0 0.0
      %118 = vmatpush1.xpose.msra.mxu0 %v75
      %119 = vmatprep.subr.mxu0 0.0
      %120 = vmatpush1.xpose.msra.mxu0 %v76
      %121 = vmatprep.subr.mxu0 0.0
      %122 = vmatpush1.xpose.msra.mxu0 %v77
      %123 = vmatprep.subr.mxu0 0.0
      %124 = vmatpush1.xpose.msra.mxu0 %v78
      %125 = vmatprep.subr.mxu0 0.0
      %126 = vmatpush1.xpose.msra.mxu0 %v79
      %127 = vmatprep.subr.mxu0 0.0
      %128 = vmatpush1.xpose.msra.mxu0 %v80
      %129 = vmatprep.subr.mxu0 0.0
      %130 = vmatpush1.xpose.msra.mxu0 %v81
      %131 = vmatprep.subr.mxu0 0.0
      %132 = vmatpush1.xpose.msra.mxu0 %v82
      %133 = vmatprep.subr.mxu0 0.0
      %134 = vmatpush1.xpose.msra.mxu0 %v83
      %135 = vmatprep.subr.mxu0 0.0
      %136 = vmatpush1.xpose.msra.mxu0 %v84
      %137 = vmatprep.subr.mxu0 0.0
      %138 = vmatpush1.xpose.msra.mxu0 %v85
      %139 = vmatprep.subr.mxu0 0.0
      %140 = vmatpush1.xpose.msra.mxu0 %v86
      %141 = vmatprep.subr.mxu0 0.0
      %142 = vmatpush1.xpose.msra.mxu0 %v87
      %143 = vmatprep.subr.mxu0 0.0
      %144 = vmatpush1.xpose.msra.mxu0 %v88
      %145 = vmatprep.subr.mxu0 0.0
      %146 = vmatpush1.xpose.msra.mxu0 %v89
      %147 = vmatprep.subr.mxu0 0.0
      %148 = vmatpush1.xpose.msra.mxu0 %v90
      %149 = vmatprep.subr.mxu0 0.0
      %150 = vmatpush1.xpose.msra.mxu0 %v91
      %151 = vmatprep.subr.mxu0 0.0
      %152 = vmatpush1.xpose.msra.mxu0 %v92
      %153 = vmatprep.subr.mxu0 0.0
      %154 = vmatpush1.xpose.msra.mxu0 %v93
      %155 = vmatprep.subr.mxu0 0.0
      %156 = vmatpush1.xpose.msra.mxu0 %v94
      %157 = vmatprep.subr.mxu0 0.0
      %158 = vmatpush1.xpose.msra.mxu0 %v95
      %159 = vmatprep.subr.mxu0 0.0
      %160 = vmatpush1.xpose.msra.mxu0 %v96
      %161 = vmatprep.mubr.f32.mxu0 0.0
      %162 = vmatmul.mubr.f32.gmra.mrb[0].mxu0 1.0
      %v163 = vpop.f32.mrb[0].mxu0
      %v164 = vadd.f32 0.0, %v163
      %v165 = vpop.f32.mrb[0].mxu0
      %v166 = vadd.f32 0.0, %v165
      %167 = vdwg.mxu0
      %v168 = vmax.f32 %v164, 1e-24
      %v169 = vmax.f32 %v166, 1e-24
      %v170 = vrsqrt.pop %v168
      %v171 = vrsqrt.pop %v169
      %v174 = vcombine.low %v170, %v171
      %v176 = vunpack.c.l.s4 1966171168
      %v177 = vunpack.c.0.s8 %v176
      %v178 = vlaneseq
      %v179 = vshrl.u32 %v178, 7
      %v180 = vsub.s32 %v177, %v179
      %v181 = vrot.slane %v174, %v180
      %v183 = vunpack.c.l.s4 1966171168
      %v184 = vunpack.c.0.s8 %v183
      %v185 = vlaneseq
      %v186 = vshrl.u32 %v185, 7
      %v187 = vsub.s32 %v184, %v186
      %v188 = vrot.slane %v181, %v187
      %v190 = vlaneseq
      %vm191 = vcmp.ge.s32.totalorder %v190, 0
      %vm192 = vcmp.lt.s32.totalorder %v190, 256
      %vm193 = vmand %vm191, %vm192
      %194 = vst.msk [vmem:[#allocation2] sm:$0x3] %vm193, %v188
    $region21: #{tpu_custom_call.1} parent=1 // pred_fallthru
      _
    %v195 = vld [vmem:[%s0] sm:$0xff]
    %v196 = vld [vmem:[#allocation3] sm:$0xff]
    %v197 = vld [vmem:[#allocation3 + $0x8] sm:$0xff]
    %v198 = vld [vmem:[#allocation3 + $0x10] sm:$0xff]
    %v199 = vld [vmem:[#allocation3 + $0x18] sm:$0xff]
    %v200 = vld [vmem:[#allocation3 + $0x20] sm:$0xff]
    %v201 = vld [vmem:[#allocation3 + $0x28] sm:$0xff]
    %v202 = vld [vmem:[#allocation3 + $0x30] sm:$0xff]
    %v203 = vld [vmem:[#allocation3 + $0x38] sm:$0xff]
    %v204 = vld [vmem:[#allocation3 + $0x40] sm:$0xff]
    %v205 = vld [vmem:[#allocation3 + $0x48] sm:$0xff]
    %v206 = vld [vmem:[#allocation3 + $0x50] sm:$0xff]
    %v207 = vld [vmem:[#allocation3 + $0x58] sm:$0xff]
    %v208 = vld [vmem:[#allocation3 + $0x60] sm:$0xff]
    %v209 = vld [vmem:[#allocation3 + $0x68] sm:$0xff]
    %v210 = vld [vmem:[#allocation3 + $0x70] sm:$0xff]
    %v211 = vld [vmem:[#allocation3 + $0x78] sm:$0xff]
    %v212 = vld [vmem:[#allocation3 + $0x80] sm:$0xff]
    %v213 = vld [vmem:[#allocation3 + $0x88] sm:$0xff]
    %v214 = vld [vmem:[#allocation3 + $0x90] sm:$0xff]
    %v215 = vld [vmem:[#allocation3 + $0x98] sm:$0xff]
    %v216 = vld [vmem:[#allocation3 + $0xa0] sm:$0xff]
    %v217 = vld [vmem:[#allocation3 + $0xa8] sm:$0xff]
    %v218 = vld [vmem:[#allocation3 + $0xb0] sm:$0xff]
    %v219 = vld [vmem:[#allocation3 + $0xb8] sm:$0xff]
    %v220 = vld [vmem:[#allocation3 + $0xc0] sm:$0xff]
    %v221 = vld [vmem:[#allocation3 + $0xc8] sm:$0xff]
    %v222 = vld [vmem:[#allocation3 + $0xd0] sm:$0xff]
    %v223 = vld [vmem:[#allocation3 + $0xd8] sm:$0xff]
    %v224 = vld [vmem:[#allocation3 + $0xe0] sm:$0xff]
    %v225 = vld [vmem:[#allocation3 + $0xe8] sm:$0xff]
    %v226 = vld [vmem:[#allocation3 + $0xf0] sm:$0xff]
    %v227 = vld [vmem:[#allocation3 + $0xf8] sm:$0xff]
    %228 = vmatprep.subr.mxu0 0.0
    %229 = vmatpush1.xpose.msra.mxu0 %v196
    %230 = vmatprep.subr.mxu0 0.0
    %231 = vmatpush1.xpose.msra.mxu0 %v197
    %232 = vmatprep.subr.mxu0 0.0
    %233 = vmatpush1.xpose.msra.mxu0 %v198
    %234 = vmatprep.subr.mxu0 0.0
    %235 = vmatpush1.xpose.msra.mxu0 %v199
    %236 = vmatprep.subr.mxu0 0.0
    %237 = vmatpush1.xpose.msra.mxu0 %v200
    %238 = vmatprep.subr.mxu0 0.0
    %239 = vmatpush1.xpose.msra.mxu0 %v201
    %240 = vmatprep.subr.mxu0 0.0
    %241 = vmatpush1.xpose.msra.mxu0 %v202
    %242 = vmatprep.subr.mxu0 0.0
    %243 = vmatpush1.xpose.msra.mxu0 %v203
    %244 = vmatprep.subr.mxu0 0.0
    %245 = vmatpush1.xpose.msra.mxu0 %v204
    %246 = vmatprep.subr.mxu0 0.0
    %247 = vmatpush1.xpose.msra.mxu0 %v205
    %248 = vmatprep.subr.mxu0 0.0
    %249 = vmatpush1.xpose.msra.mxu0 %v206
    %250 = vmatprep.subr.mxu0 0.0
    %251 = vmatpush1.xpose.msra.mxu0 %v207
    %252 = vmatprep.subr.mxu0 0.0
    %253 = vmatpush1.xpose.msra.mxu0 %v208
    %254 = vmatprep.subr.mxu0 0.0
    %255 = vmatpush1.xpose.msra.mxu0 %v209
    %256 = vmatprep.subr.mxu0 0.0
    %257 = vmatpush1.xpose.msra.mxu0 %v210
    %258 = vmatprep.subr.mxu0 0.0
    %259 = vmatpush1.xpose.msra.mxu0 %v211
    %260 = vmatprep.subr.mxu0 0.0
    %261 = vmatpush1.xpose.msra.mxu0 %v212
    %262 = vmatprep.subr.mxu0 0.0
    %263 = vmatpush1.xpose.msra.mxu0 %v213
    %264 = vmatprep.subr.mxu0 0.0
    %265 = vmatpush1.xpose.msra.mxu0 %v214
    %266 = vmatprep.subr.mxu0 0.0
    %267 = vmatpush1.xpose.msra.mxu0 %v215
    %268 = vmatprep.subr.mxu0 0.0
    %269 = vmatpush1.xpose.msra.mxu0 %v216
    %270 = vmatprep.subr.mxu0 0.0
    %271 = vmatpush1.xpose.msra.mxu0 %v217
    %272 = vmatprep.subr.mxu0 0.0
    %273 = vmatpush1.xpose.msra.mxu0 %v218
    %274 = vmatprep.subr.mxu0 0.0
    %275 = vmatpush1.xpose.msra.mxu0 %v219
    %276 = vmatprep.subr.mxu0 0.0
    %277 = vmatpush1.xpose.msra.mxu0 %v220
    %278 = vmatprep.subr.mxu0 0.0
    %279 = vmatpush1.xpose.msra.mxu0 %v221
    %280 = vmatprep.subr.mxu0 0.0
    %281 = vmatpush1.xpose.msra.mxu0 %v222
    %282 = vmatprep.subr.mxu0 0.0
    %283 = vmatpush1.xpose.msra.mxu0 %v223
    %284 = vmatprep.subr.mxu0 0.0
    %285 = vmatpush1.xpose.msra.mxu0 %v224
    %286 = vmatprep.subr.mxu0 0.0
    %287 = vmatpush1.xpose.msra.mxu0 %v225
    %288 = vmatprep.subr.mxu0 0.0
    %289 = vmatpush1.xpose.msra.mxu0 %v226
    %290 = vmatprep.subr.mxu0 0.0
    %291 = vmatpush1.xpose.msra.mxu0 %v227
    %292 = vmatprep.mubr.f32.mxu0 0.0
    %293 = vmatmul.mubr.f32.gmra.mrb[0].mxu0 %v195
    %v294 = vpop.f32.mrb[0].mxu0
    %v295 = vadd.f32 0.0, %v294
    %v296 = vpop.f32.mrb[0].mxu0
    %v297 = vadd.f32 0.0, %v296
    %298 = vdwg.mxu0
    %v299 = vld [vmem:[#allocation2] sm:$0x3]
    %v301 = vlaneseq
    %v302 = vshrl.u32 %v301, 7
    %v303 = vsub.s32 0, %v302
    %v304 = vrot.slane %v299, %v303
    %v305 = vlaneseq
    %v306 = vshrl.u32 %v305, 7
    %v307 = vsub.s32 1, %v306
    %v308 = vrot.slane %v299, %v307
    %v311 = vmul.f32 %v295, %v304
    %v312 = vmul.f32 %v297, %v308
    %v313 = vld [vmem:[%s1] sm:$0xff]
    %s314 = smul.u32 0, 256
    %v315 = vstv %s314
    %v316 = vsub.s32 %v313, %v315
    %v317 = vlaneseq
    %v318 = vand.u32 %v317, 127
    %v319 = vadd.s32 %v318, 128
    %320 = vset.pattern.permute.xlu0 0
    %321 = vperm.xlu0 %320, %v316
    %v322 = vpop.permute.xlu0 %321
    %vm323 = vcmp.eq.s32.totalorder %v322, %v318
    %vm324 = vcmp.eq.s32.totalorder %v322, %v319
    %v325 = vsel %vm323, %v311, 0.0
    %v326 = vsel %vm324, %v312, 0.0
    %v327 = vadd.f32 %v325, %v326
    %328 = vadd.xlane.f32.xlu0 %v327
    %v329 = vpop.xlane.xlu0 %328
    %v330 = vmul.f32 %v329, %v329
    %v331 = vsub.f32 1.0, %v330
    %v332 = vmax.f32 %v331, 0.0
    %v333 = vmin.f32 %v332, 1.0
    %v334 = vrsqrt.pop %v333
    %v335 = vmul.f32 %v333, %v334
    %vm336 = vcmp.eq.f32.partialorder %v333, inf
    %v337 = vsel %vm336, %v333, %v335
    %vm338 = vcmp.eq.f32.partialorder %v333, 0.0
    %v339 = vand.u32 %v333, 2147483648
    %v340 = vsel %vm338, %v339, %v337
    %v341 = vmul.f32 %v329, 0.87758255
    %v342 = vmul.f32 %v340, 0.47942555
    %v343 = vsub.f32 %v341, %v342
    %vm344 = vcmp.gt.f32.partialorder %v329, -0.87758255
    %v345 = vsub.f32 %v329, 0.23971277
    %v346 = vsel %vm344, %v343, %v345
    %v347 = vsub.f32 %v346, %v329
    %v348 = vmul.f32 %v347, 32.0
    %v349 = vmul.f32 %v311, 32.0
    %v350 = vmul.f32 %v312, 32.0
    %v351 = vsel %vm323, %v348, 0.0
    %v352 = vsel %vm324, %v348, 0.0
    %v353 = vadd.f32 %v349, %v351
    %v354 = vadd.f32 %v350, %v352
    %355 = vst [vmem:[#allocation6] sm:$0xff] %v353
    %356 = vst [vmem:[#allocation6 + $0x8] sm:$0xff] %v354
    // Predicated region
    $region22: #{tpu_custom_call.1} parent=1 // pred_check
      _
    $region23: #{tpu_custom_call.1} parent=1 // pred_check_branch
      %358 = sbr.rel (0) target = $region25
    $region24: #{tpu_custom_call.1} parent=1 // pred_region
      %s360 = ssub.s32 256, 256
      %361 = vsyncadd [#allocation5], %s360
      %s363 = sshll.u32 [#allocation6], 4
      %s364 = int_to_ptr.vmem [resolvable:$true] %s363
      %366 = dma.vmem_to_hbm [thread:$0]  %s364, 256, %s3, [#allocation5]
    $region25: #{tpu_custom_call.1} parent=1 // pred_fallthru
      _
    // Predicated region
    $region26: #{tpu_custom_call.1} parent=1 // pred_check
      _
    $region27: #{tpu_custom_call.1} parent=1 // pred_check_branch
      %368 = sbr.rel (0) target = $region29
    $region28: #{tpu_custom_call.1} parent=1 // pred_region
      %369 = dma.done [#allocation5], 256
    $region29: #{tpu_custom_call.1} parent=1 // pred_fallthru
      _
    %370 = vsyncpa [#allocation4], 1
    %371 = vsyncpa [#allocation5], 1

</llo_original>
